<compile_context>
chip_gen: v7x
topology: tpu7x:2x2x1
jax: 0.10.0
libtpu: 0.0.40
codegen_flags: <defaults>
</compile_context>

<pallas_src>
import functools

import jax
import jax.numpy as jnp
from jax.experimental import pallas as pl
from jax.experimental.pallas import tpu as pltpu


def _leaky_relu(x, negative_slope=0.01):
    # Valid for 0 < slope < 1: one vmul + one vmax on the VPU.
    return jnp.maximum(x, negative_slope * x)


def _submlp_kernel(*refs):
    """Fused batch-major MLP over one batch tile.

    refs = (x_ref, w0_ref, ..., wL_ref, out_ref)
      x_ref:   (batch_tile, in_features)    f32 (cast to bf16 in-kernel)
      wi_ref:  (in_i, out_i)                bf16, transposed nn.Linear weight
      out_ref: (batch_tile, out_features)   f32

    Each layer: act = leaky_relu(h @ W_i).  The tiny W_i is the stationary MXU
    RHS; the batch tile streams through the MXU as LHS rows.
    """
    x_ref = refs[0]
    w_refs = refs[1:-1]
    out_ref = refs[-1]

    h = x_ref[...].astype(jnp.bfloat16)  # cheap VPU cast, hidden under MXU time
    act = None
    for w_ref in w_refs:
        act = jnp.dot(h, w_ref[...], preferred_element_type=jnp.float32)
        act = _leaky_relu(act, 0.01)
        h = act.astype(jnp.bfloat16)
    out_ref[...] = act.astype(out_ref.dtype)


@functools.partial(jax.jit, static_argnames=("batch_tile",))
def submlp_forward(x, weights_t, batch_tile=2048):
    """x: (B, in_features) float32.
    weights_t: list of (in_i, out_i) bf16 matrices -- PyTorch nn.Linear
    weights pre-transposed and pre-cast ONCE, outside this jitted call.
    Returns (B, out_features) in x.dtype."""
    B, in_dim = x.shape
    out_dim = weights_t[-1].shape[1]

    bt = min(batch_tile, B)
    if bt < B:
        # Multiple of 256 (MXU tile width on v6e/v7x, 8-sublane aligned);
        # fall back to whole-batch if the requested tile is too small.
        bt = (bt // 256) * 256
        if bt == 0:
            bt = B
    grid = (pl.cdiv(B, bt),)
    # NOTE: if B % bt != 0 the trailing block reads garbage rows and its
    # out-of-range writes are dropped; harmless because every output row
    # depends only on its own input row (no cross-batch reduction in-kernel).

    in_specs = [pl.BlockSpec((bt, in_dim), lambda i: (i, 0))]
    for w in weights_t:
        # Grid-invariant, whole-resident, single-buffered weight blocks.
        in_specs.append(
            pl.BlockSpec(w.shape, lambda i: (0, 0), pipeline_mode=pl.Buffered(1))
        )
    out_spec = pl.BlockSpec((bt, out_dim), lambda i: (i, 0))

    # TODO(synk): large-hidden regime (hidden in the thousands): do NOT keep
    # hidden x hidden weights whole-resident; tile K with the reduction axis
    # last in the grid, keep weight blocks bf16 + Buffered(1), and set
    # vmem_limit_bytes explicitly (v7x has only 64 MiB of VMEM).

    flops = 2 * B * sum(int(w.shape[0]) * int(w.shape[1]) for w in weights_t)
    bytes_accessed = (
        x.dtype.itemsize * B * in_dim
        + x.dtype.itemsize * B * out_dim
        + sum(int(w.size) * w.dtype.itemsize for w in weights_t)
    )

    return pl.pallas_call(
        _submlp_kernel,
        out_shape=jax.ShapeDtypeStruct((B, out_dim), x.dtype),
        grid_spec=pl.GridSpec(grid=grid, in_specs=in_specs, out_specs=out_spec),
        compiler_params=pltpu.CompilerParams(
            dimension_semantics=("parallel",),
        ),
        cost_estimate=pl.CostEstimate(
            flops=flops, transcendentals=0, bytes_accessed=bytes_accessed
        ),
    )(x, *weights_t)


def make_submlp_params(key, input_size, hidden_size, output_size, num_layers):
    """Deterministic init matching nn.Linear(in, out, bias=False).

    Returns f32 weights in PyTorch layout: (out_features, in_features)."""
    dims = [input_size] + [hidden_size] * (num_layers - 1) + [output_size]
    weights = []
    for i in range(num_layers):
        fan_in, fan_out = dims[i], dims[i + 1]
        key, sub = jax.random.split(key)
        bound = fan_in ** -0.5  # Kaiming-uniform-ish bound like PyTorch default.
        weights.append(
            jax.random.uniform(
                sub, (fan_out, fan_in), minval=-bound, maxval=bound,
                dtype=jnp.float32,
            )
        )
    return weights


def prep_weights(weights):
    """One-time conversion to the kernel's compute layout: (in, out), bf16."""
    return [jnp.asarray(w.T, dtype=jnp.bfloat16) for w in weights]


def submlp_reference(x, weights):
    """Pure-JAX f32 reference matching the PyTorch forward (PyTorch layout)."""
    h = x
    for w in weights:
        z = h @ w.T
        h = jnp.maximum(z, 0.01 * z)
    return h


if __name__ == "__main__":
    input_size = 7
    hidden_size = 32
    output_size = 1
    num_layers = 4
    batch = 1024       # 4 batch tiles -> >= 2 blocks per TensorCore on v7x
    batch_tile = 256

    key = jax.random.PRNGKey(0)
    key, xk = jax.random.split(key)
    x = jax.random.normal(xk, (batch, input_size), dtype=jnp.float32)

    weights = make_submlp_params(
        key, input_size, hidden_size, output_size, num_layers
    )
    weights_t = prep_weights(weights)  # (in, out) bf16, done once outside the jit

    out = submlp_forward(x, weights_t, batch_tile=batch_tile)
    out = jax.block_until_ready(out)

    ref = submlp_reference(x, weights)
    assert out.shape == (batch, output_size), out.shape
    # bf16 matmul operands (f32 accumulation): tolerance loosened vs f32 ref.
    max_err = float(jnp.max(jnp.abs(out - ref)))
    assert jnp.allclose(out, ref, atol=5e-2, rtol=5e-2), (
        f"mismatch: max abs err {max_err}"
    )

    print("KERNEL_OK")
</pallas_src>

<mosaic_0001>
module attributes {stable_mosaic.version = 11 : i64} {
  func.func @_submlp_kernel(%arg0: i32, %arg1: memref<256x7xf32, #tpu.memory_space<vmem>>, %arg2: memref<7x32xbf16, #tpu.memory_space<vmem>>, %arg3: memref<32x32xbf16, #tpu.memory_space<vmem>>, %arg4: memref<32x32xbf16, #tpu.memory_space<vmem>>, %arg5: memref<32x1xbf16, #tpu.memory_space<vmem>>, %arg6: memref<256x1xf32, #tpu.memory_space<vmem>>) attributes {dimension_semantics = [#tpu.dimension_semantics<parallel>], iteration_bounds = array<i64: 4>, scalar_prefetch = 0 : i64, scratch_operands = 0 : i64, tpu.core_type = #tpu.core_type<tc>, window_params = [{transform_indices = @transform_0, window_bounds = array<i64: 256, 7>}, {pipeline_mode = #tpu.pipeline_mode<synchronous>, transform_indices = @transform_1, window_bounds = array<i64: 7, 32>}, {pipeline_mode = #tpu.pipeline_mode<synchronous>, transform_indices = @transform_2, window_bounds = array<i64: 32, 32>}, {pipeline_mode = #tpu.pipeline_mode<synchronous>, transform_indices = @transform_3, window_bounds = array<i64: 32, 32>}, {pipeline_mode = #tpu.pipeline_mode<synchronous>, transform_indices = @transform_4, window_bounds = array<i64: 32, 1>}, {transform_indices = @transform_5, window_bounds = array<i64: 256, 1>}]} {
    %c0 = arith.constant 0 : index
    %c0_0 = arith.constant 0 : index
    %0 = vector.load %arg1[%c0, %c0_0] : memref<256x7xf32, #tpu.memory_space<vmem>>, vector<256x7xf32>
    %1 = arith.truncf %0 : vector<256x7xf32> to vector<256x7xbf16>
    %c0_1 = arith.constant 0 : index
    %c0_2 = arith.constant 0 : index
    %2 = vector.load %arg2[%c0_1, %c0_2] : memref<7x32xbf16, #tpu.memory_space<vmem>>, vector<7x32xbf16>
    %cst = arith.constant dense<0.000000e+00> : vector<256x32xf32>
    %3 = tpu.matmul %1, %2, %cst {dimension_numbers = #tpu.dot_dimension_numbers<[1], [0], [0], [1], [0, 0, 1, 1], [], []>} : vector<256x7xbf16>, vector<7x32xbf16>, vector<256x32xf32> -> vector<256x32xf32>
    %cst_3 = arith.constant 0.00999999977 : f32
    %4 = vector.broadcast %cst_3 : f32 to vector<256x32xf32>
    %5 = arith.mulf %4, %3 : vector<256x32xf32>
    %6 = arith.maximumf %3, %5 : vector<256x32xf32>
    %7 = arith.truncf %6 : vector<256x32xf32> to vector<256x32xbf16>
    %c0_4 = arith.constant 0 : index
    %c0_5 = arith.constant 0 : index
    %8 = vector.load %arg3[%c0_4, %c0_5] : memref<32x32xbf16, #tpu.memory_space<vmem>>, vector<32x32xbf16>
    %cst_6 = arith.constant dense<0.000000e+00> : vector<256x32xf32>
    %9 = tpu.matmul %7, %8, %cst_6 {dimension_numbers = #tpu.dot_dimension_numbers<[1], [0], [0], [1], [0, 0, 1, 1], [], []>} : vector<256x32xbf16>, vector<32x32xbf16>, vector<256x32xf32> -> vector<256x32xf32>
    %cst_7 = arith.constant 0.00999999977 : f32
    %10 = vector.broadcast %cst_7 : f32 to vector<256x32xf32>
    %11 = arith.mulf %10, %9 : vector<256x32xf32>
    %12 = arith.maximumf %9, %11 : vector<256x32xf32>
    %13 = arith.truncf %12 : vector<256x32xf32> to vector<256x32xbf16>
    %c0_8 = arith.constant 0 : index
    %c0_9 = arith.constant 0 : index
    %14 = vector.load %arg4[%c0_8, %c0_9] : memref<32x32xbf16, #tpu.memory_space<vmem>>, vector<32x32xbf16>
    %cst_10 = arith.constant dense<0.000000e+00> : vector<256x32xf32>
    %15 = tpu.matmul %13, %14, %cst_10 {dimension_numbers = #tpu.dot_dimension_numbers<[1], [0], [0], [1], [0, 0, 1, 1], [], []>} : vector<256x32xbf16>, vector<32x32xbf16>, vector<256x32xf32> -> vector<256x32xf32>
    %cst_11 = arith.constant 0.00999999977 : f32
    %16 = vector.broadcast %cst_11 : f32 to vector<256x32xf32>
    %17 = arith.mulf %16, %15 : vector<256x32xf32>
    %18 = arith.maximumf %15, %17 : vector<256x32xf32>
    %19 = arith.truncf %18 : vector<256x32xf32> to vector<256x32xbf16>
    %c0_12 = arith.constant 0 : index
    %c0_13 = arith.constant 0 : index
    %20 = vector.load %arg5[%c0_12, %c0_13] : memref<32x1xbf16, #tpu.memory_space<vmem>>, vector<32x1xbf16>
    %cst_14 = arith.constant dense<0.000000e+00> : vector<256x1xf32>
    %21 = tpu.matmul %19, %20, %cst_14 {dimension_numbers = #tpu.dot_dimension_numbers<[1], [0], [0], [1], [0, 0, 1, 1], [], []>} : vector<256x32xbf16>, vector<32x1xbf16>, vector<256x1xf32> -> vector<256x1xf32>
    %cst_15 = arith.constant 0.00999999977 : f32
    %22 = vector.broadcast %cst_15 : f32 to vector<256x1xf32>
    %23 = arith.mulf %22, %21 : vector<256x1xf32>
    %24 = arith.maximumf %21, %23 : vector<256x1xf32>
    %c0_16 = arith.constant 0 : index
    %c0_17 = arith.constant 0 : index
    %25 = vector.load %arg6[%c0_16, %c0_17] : memref<256x1xf32, #tpu.memory_space<vmem>>, vector<256x1xf32>
    tpu.vector_store %arg6[%c0_16, %c0_17], %24 {strides = array<i32>} : memref<256x1xf32, #tpu.memory_space<vmem>>, vector<256x1xf32>,
    return
  }
  func.func @transform_0(%arg0: i32) -> (i32, i32) {
    %c0_i32 = arith.constant 0 : i32
    %c0_i32_0 = arith.constant 0 : i32
    return %arg0, %c0_i32 : i32, i32
  }
  func.func @transform_1(%arg0: i32) -> (i32, i32) {
    %c0_i32 = arith.constant 0 : i32
    %c0_i32_0 = arith.constant 0 : i32
    %c0_i32_1 = arith.constant 0 : i32
    return %c0_i32, %c0_i32_0 : i32, i32
  }
  func.func @transform_2(%arg0: i32) -> (i32, i32) {
    %c0_i32 = arith.constant 0 : i32
    %c0_i32_0 = arith.constant 0 : i32
    %c0_i32_1 = arith.constant 0 : i32
    return %c0_i32, %c0_i32_0 : i32, i32
  }
  func.func @transform_3(%arg0: i32) -> (i32, i32) {
    %c0_i32 = arith.constant 0 : i32
    %c0_i32_0 = arith.constant 0 : i32
    %c0_i32_1 = arith.constant 0 : i32
    return %c0_i32, %c0_i32_0 : i32, i32
  }
  func.func @transform_4(%arg0: i32) -> (i32, i32) {
    %c0_i32 = arith.constant 0 : i32
    %c0_i32_0 = arith.constant 0 : i32
    %c0_i32_1 = arith.constant 0 : i32
    return %c0_i32, %c0_i32_0 : i32, i32
  }
  func.func @transform_5(%arg0: i32) -> (i32, i32) {
    %c0_i32 = arith.constant 0 : i32
    %c0_i32_0 = arith.constant 0 : i32
    return %arg0, %c0_i32 : i32, i32
  }
}

</mosaic_0001>

<llo_original>
// kernel: submlp_forward.1
$region0: #{submlp_forward.1}
  #allocation0 [shape = 'u32[]', space=smem, size = 0x4, offset = 0x4, fixed_abs, tag = 'smem constant byte address 0x4 - core index']
  #allocation1 [shape = 'u32[144,128]{1,0:T(1,128)}', space=vmem, size = 0x12000, scoped, tag = 'internal scratch']
  %s0 = inlined_call_operand.vmem [shape: f32[1024,7], index: 0, kind: input, shape index: {}]
  %s1 = inlined_call_operand.vmem [shape: bf16[7,32], index: 1, kind: input, shape index: {}]
  %s2 = inlined_call_operand.vmem [shape: bf16[32,32], index: 2, kind: input, shape index: {}]
  %s3 = inlined_call_operand.vmem [shape: bf16[32,32], index: 3, kind: input, shape index: {}]
  %s4 = inlined_call_operand.vmem [shape: bf16[32,1], index: 4, kind: input, shape index: {}]
  %s5 = inlined_call_operand.vmem [shape: f32[1024,1], index: 5, kind: output, shape index: {}]
  %s6 = sld [smem:[#allocation0]]
  $region53: #{submlp_forward.1} parent=0
    _
  %s8 = ssub.s32 1, %s6
  %s9 = scalar_select 0, %s8, %s6
  loop: start=0, step=1, limit=6
  $region2: #{submlp_forward.1} parent=0 // loop_pre_header
    _
  $region3: #{submlp_forward.1} parent=0 // loop_header
    %s11 = sphi 0, %s15
    %p12 = scmp.ge.s32.totalorder %s11, 6
    %s21 = sphi 0, %s23
    %s24 = sphi 0, %s21
    %s25 = sphi 0, %s24
    %s41 = sphi 0, %s25
    %s45 = sphi 0, %s45
    %s47 = sphi 0, %s45
    %s48 = sphi 0, %s47
    %s62 = sphi 0, %s48
    %s66 = sphi 0, %s66
    %s68 = sphi 0, %s66
    %s69 = sphi 0, %s68
    %s83 = sphi 0, %s69
    %s87 = sphi 0, %s87
    %s89 = sphi 0, %s87
    %s90 = sphi 0, %s89
    %s104 = sphi 0, %s90
    %s108 = sphi 0, %s108
    %s110 = sphi 0, %s108
    %s111 = sphi 0, %s110
    %s125 = sphi 0, %s111
    %s131 = sphi 0, %s133
    %s134 = sphi 0, %s131
    %s135 = sphi 0, %s134
    %s151 = sphi 0, %s135
  $region4: #{submlp_forward.1} parent=0 // loop_header_branch
    %14 = sbr.rel (%p12) target = $region8
  $region5: #{submlp_forward.1} parent=0 // loop_body
    %s16 = ssub.s32 %s11, 1
    %s17 = ssub.s32 %s11, 2
    %s18 = sadd.s32 %s11, 1
    %s19 = ssub.s32 %s11, %s18
    %p20 = scmp.eq.s32.totalorder %s19, 0
    %s22 = sadd.s32 %s21, 1
    %s23 = scalar_select %p20, %s21, %s22
    %p26 = pneg %p20
    %p27 = scmp.eq.s32.totalorder %s11, 3
    %p28 = por %p26, %p27
    %p29 = scmp.ne.s32.totalorder %s21, %s24
    %p30 = scmp.eq.s32.totalorder %s11, 0
    %p31 = por %p29, %p30
    %p32 = scmp.ne.s32.totalorder %s21, %s24
    %p33 = scmp.eq.s32.totalorder %s16, 3
    %p34 = por %p32, %p33
    %p35 = scmp.ne.s32.totalorder %s24, %s25
    %p36 = scmp.eq.s32.totalorder %s16, 0
    %p37 = por %p35, %p36
    %p38 = scmp.ne.s32.totalorder %s24, %s25
    %p39 = scmp.eq.s32.totalorder %s17, 3
    %p40 = por %p38, %p39
    %p42 = scmp.ne.s32.totalorder %s25, %s41
    %p43 = scmp.eq.s32.totalorder %s17, 0
    %p44 = por %p42, %p43
    %s46 = sadd.s32 %s45, 1
    %p49 = scmp.eq.s32.totalorder %s11, 3
    %p50 = scmp.ne.s32.totalorder %s45, %s47
    %p51 = scmp.eq.s32.totalorder %s11, 0
    %p52 = por %p50, %p51
    %p53 = scmp.ne.s32.totalorder %s45, %s47
    %p54 = scmp.eq.s32.totalorder %s16, 3
    %p55 = por %p53, %p54
    %p56 = scmp.ne.s32.totalorder %s47, %s48
    %p57 = scmp.eq.s32.totalorder %s16, 0
    %p58 = por %p56, %p57
    %p59 = scmp.ne.s32.totalorder %s47, %s48
    %p60 = scmp.eq.s32.totalorder %s17, 3
    %p61 = por %p59, %p60
    %p63 = scmp.ne.s32.totalorder %s48, %s62
    %p64 = scmp.eq.s32.totalorder %s17, 0
    %p65 = por %p63, %p64
    %s67 = sadd.s32 %s66, 1
    %p70 = scmp.eq.s32.totalorder %s11, 3
    %p71 = scmp.ne.s32.totalorder %s66, %s68
    %p72 = scmp.eq.s32.totalorder %s11, 0
    %p73 = por %p71, %p72
    %p74 = scmp.ne.s32.totalorder %s66, %s68
    %p75 = scmp.eq.s32.totalorder %s16, 3
    %p76 = por %p74, %p75
    %p77 = scmp.ne.s32.totalorder %s68, %s69
    %p78 = scmp.eq.s32.totalorder %s16, 0
    %p79 = por %p77, %p78
    %p80 = scmp.ne.s32.totalorder %s68, %s69
    %p81 = scmp.eq.s32.totalorder %s17, 3
    %p82 = por %p80, %p81
    %p84 = scmp.ne.s32.totalorder %s69, %s83
    %p85 = scmp.eq.s32.totalorder %s17, 0
    %p86 = por %p84, %p85
    %s88 = sadd.s32 %s87, 1
    %p91 = scmp.eq.s32.totalorder %s11, 3
    %p92 = scmp.ne.s32.totalorder %s87, %s89
    %p93 = scmp.eq.s32.totalorder %s11, 0
    %p94 = por %p92, %p93
    %p95 = scmp.ne.s32.totalorder %s87, %s89
    %p96 = scmp.eq.s32.totalorder %s16, 3
    %p97 = por %p95, %p96
    %p98 = scmp.ne.s32.totalorder %s89, %s90
    %p99 = scmp.eq.s32.totalorder %s16, 0
    %p100 = por %p98, %p99
    %p101 = scmp.ne.s32.totalorder %s89, %s90
    %p102 = scmp.eq.s32.totalorder %s17, 3
    %p103 = por %p101, %p102
    %p105 = scmp.ne.s32.totalorder %s90, %s104
    %p106 = scmp.eq.s32.totalorder %s17, 0
    %p107 = por %p105, %p106
    %s109 = sadd.s32 %s108, 1
    %p112 = scmp.eq.s32.totalorder %s11, 3
    %p113 = scmp.ne.s32.totalorder %s108, %s110
    %p114 = scmp.eq.s32.totalorder %s11, 0
    %p115 = por %p113, %p114
    %p116 = scmp.ne.s32.totalorder %s108, %s110
    %p117 = scmp.eq.s32.totalorder %s16, 3
    %p118 = por %p116, %p117
    %p119 = scmp.ne.s32.totalorder %s110, %s111
    %p120 = scmp.eq.s32.totalorder %s16, 0
    %p121 = por %p119, %p120
    %p122 = scmp.ne.s32.totalorder %s110, %s111
    %p123 = scmp.eq.s32.totalorder %s17, 3
    %p124 = por %p122, %p123
    %p126 = scmp.ne.s32.totalorder %s111, %s125
    %p127 = scmp.eq.s32.totalorder %s17, 0
    %p128 = por %p126, %p127
    %s129 = ssub.s32 %s11, %s18
    %p130 = scmp.eq.s32.totalorder %s129, 0
    %s132 = sadd.s32 %s131, 1
    %s133 = scalar_select %p130, %s131, %s132
    %p136 = pneg %p130
    %p137 = scmp.eq.s32.totalorder %s11, 3
    %p138 = por %p136, %p137
    %p139 = scmp.ne.s32.totalorder %s131, %s134
    %p140 = scmp.eq.s32.totalorder %s11, 0
    %p141 = por %p139, %p140
    %p142 = scmp.ne.s32.totalorder %s131, %s134
    %p143 = scmp.eq.s32.totalorder %s16, 3
    %p144 = por %p142, %p143
    %p145 = scmp.ne.s32.totalorder %s134, %s135
    %p146 = scmp.eq.s32.totalorder %s16, 0
    %p147 = por %p145, %p146
    %p148 = scmp.ne.s32.totalorder %s134, %s135
    %p149 = scmp.eq.s32.totalorder %s17, 3
    %p150 = por %p148, %p149
    %p152 = scmp.ne.s32.totalorder %s135, %s151
    %p153 = scmp.eq.s32.totalorder %s17, 0
    %p154 = por %p152, %p153
    %p155 = scmp.le.s32.totalorder 1, %s11
    %p156 = scmp.lt.s32.totalorder %s11, 5
    %p157 = pnand %p155, %p156
    %p158 = pneg %p157
    // Predicated region
    $region9: #{submlp_forward.1} parent=5 // pred_check
      _
    $region10: #{submlp_forward.1} parent=5 // pred_check_branch
      %160 = sbr.rel (%p157) target = $region12
    $region11: #{submlp_forward.1} parent=5 // pred_region
      %s161 = ssub.s32 %s11, 1
      // Predicated region
      $region13: #{submlp_forward.1} parent=11 // pred_check
        %p162 = pneg %p58
      $region14: #{submlp_forward.1} parent=11 // pred_check_branch
        %164 = sbr.rel (%p162) target = $region16
      $region15: #{submlp_forward.1} parent=11 // pred_region
        _
      $region16: #{submlp_forward.1} parent=11 // pred_fallthru
        _
      // Predicated region
      $region17: #{submlp_forward.1} parent=11 // pred_check
        %p165 = pneg %p79
      $region18: #{submlp_forward.1} parent=11 // pred_check_branch
        %167 = sbr.rel (%p165) target = $region20
      $region19: #{submlp_forward.1} parent=11 // pred_region
        _
      $region20: #{submlp_forward.1} parent=11 // pred_fallthru
        _
      // Predicated region
      $region21: #{submlp_forward.1} parent=11 // pred_check
        %p168 = pneg %p100
      $region22: #{submlp_forward.1} parent=11 // pred_check_branch
        %170 = sbr.rel (%p168) target = $region24
      $region23: #{submlp_forward.1} parent=11 // pred_region
        _
      $region24: #{submlp_forward.1} parent=11 // pred_fallthru
        _
      // Predicated region
      $region25: #{submlp_forward.1} parent=11 // pred_check
        %p171 = pneg %p121
      $region26: #{submlp_forward.1} parent=11 // pred_check_branch
        %173 = sbr.rel (%p171) target = $region28
      $region27: #{submlp_forward.1} parent=11 // pred_region
        _
      $region28: #{submlp_forward.1} parent=11 // pred_fallthru
        _
    $region12: #{submlp_forward.1} parent=5 // pred_fallthru
      _
    %p174 = scmp.lt.s32.totalorder %s11, 4
    // Predicated region
    $region29: #{submlp_forward.1} parent=5 // pred_check
      %p175 = pneg %p174
    $region30: #{submlp_forward.1} parent=5 // pred_check_branch
      %177 = sbr.rel (%p175) target = $region32
    $region31: #{submlp_forward.1} parent=5 // pred_region
      // Predicated region
      $region33: #{submlp_forward.1} parent=31 // pred_check
        %p178 = pneg %p31
      $region34: #{submlp_forward.1} parent=31 // pred_check_branch
        %180 = sbr.rel (%p178) target = $region36
      $region35: #{submlp_forward.1} parent=31 // pred_region
        %s181 = smul.u32 32, %s11
        %p182 = scmp.lt.s32.totalorder %s181, 127
        %s183 = scalar_select %p182, %s181, 127
        %s184 = smul.addr %s183, 8
        %s185 = scalar_lea.vmem %s0, %s184
        %s186 = smul.u32 32, %s11
      $region36: #{submlp_forward.1} parent=31 // pred_fallthru
        _
    $region32: #{submlp_forward.1} parent=5 // pred_fallthru
      _
    %p187 = scmp.le.s32.totalorder 1, %s11
    %p188 = scmp.lt.s32.totalorder %s11, 5
    %p189 = pnand %p187, %p188
    %p190 = pneg %p189
    // Predicated region
    $region37: #{submlp_forward.1} parent=5 // pred_check
      _
    $region38: #{submlp_forward.1} parent=5 // pred_check_branch
      %192 = sbr.rel (%p189) target = $region40
    $region39: #{submlp_forward.1} parent=5 // pred_region
      %s193 = ssub.s32 %s11, 1
      %s194 = smul.u32 32, %s16
      %p195 = scmp.lt.s32.totalorder %s194, 127
      %s196 = scalar_select %p195, %s194, 127
      %s197 = smul.addr %s196, 8
      %s198 = scalar_lea.vmem %s0, %s197
      %p199 = pneg %p37
      %p200 = pneg %p34
      %p201 = pneg %p58
      %p202 = pneg %p55
      %p203 = pneg %p79
      %p204 = pneg %p76
      %p205 = pneg %p100
      %p206 = pneg %p97
      %p207 = pneg %p121
      %p208 = pneg %p118
      %p209 = pneg %p147
      %p210 = pneg %p144
      %s211 = smul.u32 32, %s16
      %p212 = scmp.lt.s32.totalorder %s211, 127
      %s213 = scalar_select %p212, %s211, 127
      %s214 = smul.addr %s213, 8
      %s215 = scalar_lea.vmem %s5, %s214
      %s216 = smul.u32 32, %s16
      %p217 = scmp.lt.s32.totalorder %s216, 127
      %s218 = scalar_select %p217, %s216, 127
      %s219 = smul.addr %s218, 8
      %s220 = scalar_lea.vmem %s0, %s219
      %s221 = smul.u32 32, %s16
      %s222 = smul.u32 32, %s16
      %p223 = scmp.lt.s32.totalorder %s222, 127
      %s224 = scalar_select %p223, %s222, 127
      %s225 = smul.addr %s224, 8
      %s226 = scalar_lea.vmem %s5, %s225
      %s227 = smul.u32 32, %s16
      %v229 = vld [vmem:[%s220] sm:$0xff]
      %v230 = vld [vmem:[%s220 + $0x8] sm:$0xff]
      %v231 = vld [vmem:[%s220 + $0x10] sm:$0xff]
      %v232 = vld [vmem:[%s220 + $0x18] sm:$0xff]
      %v233 = vld [vmem:[%s220 + $0x20] sm:$0xff]
      %v234 = vld [vmem:[%s220 + $0x28] sm:$0xff]
      %v235 = vld [vmem:[%s220 + $0x30] sm:$0xff]
      %v236 = vld [vmem:[%s220 + $0x38] sm:$0xff]
      %v237 = vld [vmem:[%s220 + $0x40] sm:$0xff]
      %v238 = vld [vmem:[%s220 + $0x48] sm:$0xff]
      %v239 = vld [vmem:[%s220 + $0x50] sm:$0xff]
      %v240 = vld [vmem:[%s220 + $0x58] sm:$0xff]
      %v241 = vld [vmem:[%s220 + $0x60] sm:$0xff]
      %v242 = vld [vmem:[%s220 + $0x68] sm:$0xff]
      %v243 = vld [vmem:[%s220 + $0x70] sm:$0xff]
      %v244 = vld [vmem:[%s220 + $0x78] sm:$0xff]
      %v245 = vld [vmem:[%s220 + $0x80] sm:$0xff]
      %v246 = vld [vmem:[%s220 + $0x88] sm:$0xff]
      %v247 = vld [vmem:[%s220 + $0x90] sm:$0xff]
      %v248 = vld [vmem:[%s220 + $0x98] sm:$0xff]
      %v249 = vld [vmem:[%s220 + $0xa0] sm:$0xff]
      %v250 = vld [vmem:[%s220 + $0xa8] sm:$0xff]
      %v251 = vld [vmem:[%s220 + $0xb0] sm:$0xff]
      %v252 = vld [vmem:[%s220 + $0xb8] sm:$0xff]
      %v253 = vld [vmem:[%s220 + $0xc0] sm:$0xff]
      %v254 = vld [vmem:[%s220 + $0xc8] sm:$0xff]
      %v255 = vld [vmem:[%s220 + $0xd0] sm:$0xff]
      %v256 = vld [vmem:[%s220 + $0xd8] sm:$0xff]
      %v257 = vld [vmem:[%s220 + $0xe0] sm:$0xff]
      %v258 = vld [vmem:[%s220 + $0xe8] sm:$0xff]
      %v259 = vld [vmem:[%s220 + $0xf0] sm:$0xff]
      %v260 = vld [vmem:[%s220 + $0xf8] sm:$0xff]
      %v261 = vpack.c.bf16 %v230, %v229
      %v262 = vpack.c.bf16 %v232, %v231
      %v263 = vpack.c.bf16 %v234, %v233
      %v264 = vpack.c.bf16 %v236, %v235
      %v265 = vpack.c.bf16 %v238, %v237
      %v266 = vpack.c.bf16 %v240, %v239
      %v267 = vpack.c.bf16 %v242, %v241
      %v268 = vpack.c.bf16 %v244, %v243
      %v269 = vpack.c.bf16 %v246, %v245
      %v270 = vpack.c.bf16 %v248, %v247
      %v271 = vpack.c.bf16 %v250, %v249
      %v272 = vpack.c.bf16 %v252, %v251
      %v273 = vpack.c.bf16 %v254, %v253
      %v274 = vpack.c.bf16 %v256, %v255
      %v275 = vpack.c.bf16 %v258, %v257
      %v276 = vpack.c.bf16 %v260, %v259
      %v277 = vld [vmem:[%s1] sm:$0xf]
      %vm278 = vcmask 56320
      %v280 = vsel %vm278, %v261, 0
      %v283 = vsel %vm278, %v262, 0
      %v286 = vsel %vm278, %v263, 0
      %v289 = vsel %vm278, %v264, 0
      %v292 = vsel %vm278, %v265, 0
      %v295 = vsel %vm278, %v266, 0
      %v298 = vsel %vm278, %v267, 0
      %v301 = vsel %vm278, %v268, 0
      %v304 = vsel %vm278, %v269, 0
      %v307 = vsel %vm278, %v270, 0
      %v310 = vsel %vm278, %v271, 0
      %v313 = vsel %vm278, %v272, 0
      %v316 = vsel %vm278, %v273, 0
      %v319 = vsel %vm278, %v274, 0
      %v322 = vsel %vm278, %v275, 0
      %v325 = vsel %vm278, %v276, 0
      %vm327 = vcmask 1042432
      %vm328 = vcmask 1043456
      %v329 = vsel %vm327, 4294967295, 65535
      %v330 = vsel %vm328, %v329, 0
      %v332 = vand.u32 %v277, %v330
      %334 = vmatprep.subr.bf16.mxu0 0
      %335 = vmatpush1.bf16.msra.mxu0 %v332
      %336 = vmatprep.subr.bf16.mxu0 0
      %337 = vmatpush1.bf16.msra.mxu0 0
      %338 = vmatprep.subr.bf16.mxu0 0
      %339 = vmatpush1.bf16.msra.mxu0 0
      %340 = vmatprep.subr.bf16.mxu0 0
      %341 = vmatpush1.bf16.msra.mxu0 0
      %342 = vmatprep.subr.bf16.mxu0 0
      %343 = vmatpush1.bf16.msra.mxu0 0
      %344 = vmatprep.subr.bf16.mxu0 0
      %345 = vmatpush1.bf16.msra.mxu0 0
      %346 = vmatprep.subr.bf16.mxu0 0
      %347 = vmatpush1.bf16.msra.mxu0 0
      %348 = vmatprep.subr.bf16.mxu0 0
      %349 = vmatpush1.bf16.msra.mxu0 0
      %350 = vmatprep.subr.bf16.mxu0 0
      %351 = vmatpush1.bf16.msra.mxu0 0
      %352 = vmatprep.subr.bf16.mxu0 0
      %353 = vmatpush1.bf16.msra.mxu0 0
      %354 = vmatprep.subr.bf16.mxu0 0
      %355 = vmatpush1.bf16.msra.mxu0 0
      %356 = vmatprep.subr.bf16.mxu0 0
      %357 = vmatpush1.bf16.msra.mxu0 0
      %358 = vmatprep.subr.bf16.mxu0 0
      %359 = vmatpush1.bf16.msra.mxu0 0
      %360 = vmatprep.subr.bf16.mxu0 0
      %361 = vmatpush1.bf16.msra.mxu0 0
      %362 = vmatprep.subr.bf16.mxu0 0
      %363 = vmatpush1.bf16.msra.mxu0 0
      %364 = vmatprep.subr.bf16.mxu0 0
      %365 = vmatpush1.bf16.msra.mxu0 0
      %366 = vmatprep.mubr.bf16.mxu0 0
      %367 = vmatmul.mubr.bf16.gmra.mrb[0].mxu0 %v280
      %v368 = vpop.f32.mrb[0].mxu0
      %v369 = vadd.f32 0.0, %v368
      %v370 = vpop.f32.mrb[0].mxu0
      %v371 = vpop.f32.mrb[0].mxu0
      %v372 = vadd.f32 0.0, %v371
      %v373 = vpop.f32.mrb[0].mxu0
      %374 = vmatprep.mubr.bf16.mxu0 0
      %375 = vmatmul.mubr.bf16.gmra.mrb[0].mxu0 %v283
      %v376 = vpop.f32.mrb[0].mxu0
      %v377 = vadd.f32 0.0, %v376
      %v378 = vpop.f32.mrb[0].mxu0
      %v379 = vpop.f32.mrb[0].mxu0
      %v380 = vadd.f32 0.0, %v379
      %v381 = vpop.f32.mrb[0].mxu0
      %382 = vmatprep.mubr.bf16.mxu0 0
      %383 = vmatmul.mubr.bf16.gmra.mrb[0].mxu0 %v286
      %v384 = vpop.f32.mrb[0].mxu0
      %v385 = vadd.f32 0.0, %v384
      %v386 = vpop.f32.mrb[0].mxu0
      %v387 = vpop.f32.mrb[0].mxu0
      %v388 = vadd.f32 0.0, %v387
      %v389 = vpop.f32.mrb[0].mxu0
      %390 = vmatprep.mubr.bf16.mxu0 0
      %391 = vmatmul.mubr.bf16.gmra.mrb[0].mxu0 %v289
      %v392 = vpop.f32.mrb[0].mxu0
      %v393 = vadd.f32 0.0, %v392
      %v394 = vpop.f32.mrb[0].mxu0
      %v395 = vpop.f32.mrb[0].mxu0
      %v396 = vadd.f32 0.0, %v395
      %v397 = vpop.f32.mrb[0].mxu0
      %398 = vmatprep.mubr.bf16.mxu0 0
      %399 = vmatmul.mubr.bf16.gmra.mrb[0].mxu0 %v292
      %v400 = vpop.f32.mrb[0].mxu0
      %v401 = vadd.f32 0.0, %v400
      %v402 = vpop.f32.mrb[0].mxu0
      %v403 = vpop.f32.mrb[0].mxu0
      %v404 = vadd.f32 0.0, %v403
      %v405 = vpop.f32.mrb[0].mxu0
      %406 = vmatprep.mubr.bf16.mxu0 0
      %407 = vmatmul.mubr.bf16.gmra.mrb[0].mxu0 %v295
      %v408 = vpop.f32.mrb[0].mxu0
      %v409 = vadd.f32 0.0, %v408
      %v410 = vpop.f32.mrb[0].mxu0
      %v411 = vpop.f32.mrb[0].mxu0
      %v412 = vadd.f32 0.0, %v411
      %v413 = vpop.f32.mrb[0].mxu0
      %414 = vmatprep.mubr.bf16.mxu0 0
      %415 = vmatmul.mubr.bf16.gmra.mrb[0].mxu0 %v298
      %v416 = vpop.f32.mrb[0].mxu0
      %v417 = vadd.f32 0.0, %v416
      %v418 = vpop.f32.mrb[0].mxu0
      %v419 = vpop.f32.mrb[0].mxu0
      %v420 = vadd.f32 0.0, %v419
      %v421 = vpop.f32.mrb[0].mxu0
      %422 = vmatprep.mubr.bf16.mxu0 0
      %423 = vmatmul.mubr.bf16.gmra.mrb[0].mxu0 %v301
      %v424 = vpop.f32.mrb[0].mxu0
      %v425 = vadd.f32 0.0, %v424
      %v426 = vpop.f32.mrb[0].mxu0
      %v427 = vpop.f32.mrb[0].mxu0
      %v428 = vadd.f32 0.0, %v427
      %v429 = vpop.f32.mrb[0].mxu0
      %430 = vmatprep.mubr.bf16.mxu0 0
      %431 = vmatmul.mubr.bf16.gmra.mrb[0].mxu0 %v304
      %v432 = vpop.f32.mrb[0].mxu0
      %v433 = vadd.f32 0.0, %v432
      %v434 = vpop.f32.mrb[0].mxu0
      %v435 = vpop.f32.mrb[0].mxu0
      %v436 = vadd.f32 0.0, %v435
      %v437 = vpop.f32.mrb[0].mxu0
      %438 = vmatprep.mubr.bf16.mxu0 0
      %439 = vmatmul.mubr.bf16.gmra.mrb[0].mxu0 %v307
      %v440 = vpop.f32.mrb[0].mxu0
      %v441 = vadd.f32 0.0, %v440
      %v442 = vpop.f32.mrb[0].mxu0
      %v443 = vpop.f32.mrb[0].mxu0
      %v444 = vadd.f32 0.0, %v443
      %v445 = vpop.f32.mrb[0].mxu0
      %446 = vmatprep.mubr.bf16.mxu0 0
      %447 = vmatmul.mubr.bf16.gmra.mrb[0].mxu0 %v310
      %v448 = vpop.f32.mrb[0].mxu0
      %v449 = vadd.f32 0.0, %v448
      %v450 = vpop.f32.mrb[0].mxu0
      %v451 = vpop.f32.mrb[0].mxu0
      %v452 = vadd.f32 0.0, %v451
      %v453 = vpop.f32.mrb[0].mxu0
      %454 = vmatprep.mubr.bf16.mxu0 0
      %455 = vmatmul.mubr.bf16.gmra.mrb[0].mxu0 %v313
      %v456 = vpop.f32.mrb[0].mxu0
      %v457 = vadd.f32 0.0, %v456
      %v458 = vpop.f32.mrb[0].mxu0
      %v459 = vpop.f32.mrb[0].mxu0
      %v460 = vadd.f32 0.0, %v459
      %v461 = vpop.f32.mrb[0].mxu0
      %462 = vmatprep.mubr.bf16.mxu0 0
      %463 = vmatmul.mubr.bf16.gmra.mrb[0].mxu0 %v316
      %v464 = vpop.f32.mrb[0].mxu0
      %v465 = vadd.f32 0.0, %v464
      %v466 = vpop.f32.mrb[0].mxu0
      %v467 = vpop.f32.mrb[0].mxu0
      %v468 = vadd.f32 0.0, %v467
      %v469 = vpop.f32.mrb[0].mxu0
      %470 = vmatprep.mubr.bf16.mxu0 0
      %471 = vmatmul.mubr.bf16.gmra.mrb[0].mxu0 %v319
      %v472 = vpop.f32.mrb[0].mxu0
      %v473 = vadd.f32 0.0, %v472
      %v474 = vpop.f32.mrb[0].mxu0
      %v475 = vpop.f32.mrb[0].mxu0
      %v476 = vadd.f32 0.0, %v475
      %v477 = vpop.f32.mrb[0].mxu0
      %478 = vmatprep.mubr.bf16.mxu0 0
      %479 = vmatmul.mubr.bf16.gmra.mrb[0].mxu0 %v322
      %v480 = vpop.f32.mrb[0].mxu0
      %v481 = vadd.f32 0.0, %v480
      %v482 = vpop.f32.mrb[0].mxu0
      %v483 = vpop.f32.mrb[0].mxu0
      %v484 = vadd.f32 0.0, %v483
      %v485 = vpop.f32.mrb[0].mxu0
      %486 = vmatprep.mubr.bf16.mxu0 0
      %487 = vmatmul.mubr.bf16.gmra.mrb[0].mxu0 %v325
      %v488 = vpop.f32.mrb[0].mxu0
      %v489 = vadd.f32 0.0, %v488
      %v490 = vpop.f32.mrb[0].mxu0
      %v491 = vpop.f32.mrb[0].mxu0
      %v492 = vadd.f32 0.0, %v491
      %v493 = vpop.f32.mrb[0].mxu0
      %494 = vdwg.mxu0
      %v495 = vmul.f32 %v369, 0.01
      %v496 = vmul.f32 %v372, 0.01
      %v497 = vmul.f32 %v377, 0.01
      %v498 = vmul.f32 %v380, 0.01
      %v499 = vmul.f32 %v385, 0.01
      %v500 = vmul.f32 %v388, 0.01
      %v501 = vmul.f32 %v393, 0.01
      %v502 = vmul.f32 %v396, 0.01
      %v503 = vmul.f32 %v401, 0.01
      %v504 = vmul.f32 %v404, 0.01
      %v505 = vmul.f32 %v409, 0.01
      %v506 = vmul.f32 %v412, 0.01
      %v507 = vmul.f32 %v417, 0.01
      %v508 = vmul.f32 %v420, 0.01
      %v509 = vmul.f32 %v425, 0.01
      %v510 = vmul.f32 %v428, 0.01
      %v511 = vmul.f32 %v433, 0.01
      %v512 = vmul.f32 %v436, 0.01
      %v513 = vmul.f32 %v441, 0.01
      %v514 = vmul.f32 %v444, 0.01
      %v515 = vmul.f32 %v449, 0.01
      %v516 = vmul.f32 %v452, 0.01
      %v517 = vmul.f32 %v457, 0.01
      %v518 = vmul.f32 %v460, 0.01
      %v519 = vmul.f32 %v465, 0.01
      %v520 = vmul.f32 %v468, 0.01
      %v521 = vmul.f32 %v473, 0.01
      %v522 = vmul.f32 %v476, 0.01
      %v523 = vmul.f32 %v481, 0.01
      %v524 = vmul.f32 %v484, 0.01
      %v525 = vmul.f32 %v489, 0.01
      %v526 = vmul.f32 %v492, 0.01
      %v527 = vmax.f32 %v369, %v495
      %v528 = vmax.f32 %v372, %v496
      %v529 = vmax.f32 %v377, %v497
      %v530 = vmax.f32 %v380, %v498
      %v531 = vmax.f32 %v385, %v499
      %v532 = vmax.f32 %v388, %v500
      %v533 = vmax.f32 %v393, %v501
      %v534 = vmax.f32 %v396, %v502
      %v535 = vmax.f32 %v401, %v503
      %v536 = vmax.f32 %v404, %v504
      %v537 = vmax.f32 %v409, %v505
      %v538 = vmax.f32 %v412, %v506
      %v539 = vmax.f32 %v417, %v507
      %v540 = vmax.f32 %v420, %v508
      %v541 = vmax.f32 %v425, %v509
      %v542 = vmax.f32 %v428, %v510
      %v543 = vmax.f32 %v433, %v511
      %v544 = vmax.f32 %v436, %v512
      %v545 = vmax.f32 %v441, %v513
      %v546 = vmax.f32 %v444, %v514
      %v547 = vmax.f32 %v449, %v515
      %v548 = vmax.f32 %v452, %v516
      %v549 = vmax.f32 %v457, %v517
      %v550 = vmax.f32 %v460, %v518
      %v551 = vmax.f32 %v465, %v519
      %v552 = vmax.f32 %v468, %v520
      %v553 = vmax.f32 %v473, %v521
      %v554 = vmax.f32 %v476, %v522
      %v555 = vmax.f32 %v481, %v523
      %v556 = vmax.f32 %v484, %v524
      %v557 = vmax.f32 %v489, %v525
      %v558 = vmax.f32 %v492, %v526
      %v559 = vpack.c.bf16 %v528, %v527
      %v560 = vpack.c.bf16 %v530, %v529
      %v561 = vpack.c.bf16 %v532, %v531
      %v562 = vpack.c.bf16 %v534, %v533
      %v563 = vpack.c.bf16 %v536, %v535
      %v564 = vpack.c.bf16 %v538, %v537
      %v565 = vpack.c.bf16 %v540, %v539
      %v566 = vpack.c.bf16 %v542, %v541
      %v567 = vpack.c.bf16 %v544, %v543
      %v568 = vpack.c.bf16 %v546, %v545
      %v569 = vpack.c.bf16 %v548, %v547
      %v570 = vpack.c.bf16 %v550, %v549
      %v571 = vpack.c.bf16 %v552, %v551
      %v572 = vpack.c.bf16 %v554, %v553
      %v573 = vpack.c.bf16 %v556, %v555
      %v574 = vpack.c.bf16 %v558, %v557
      %v575 = vld [vmem:[%s2] sm:$0xf]
      %v576 = vld [vmem:[%s2 + $0x4] sm:$0xf]
      %v577 = vld [vmem:[%s2 + $0x8] sm:$0xf]
      %v578 = vld [vmem:[%s2 + $0xc] sm:$0xf]
      %v583 = vunpack.c.l.b16 %v575
      %v584 = vunpack.c.l.b16 %v576
      %v585 = vunpack.c.l.b16 %v577
      %v586 = vunpack.c.l.b16 %v578
      %v587 = vpack.c.b16 %v584, %v583
      %v588 = vpack.c.b16 %v586, %v585
      %vm591 = vcmask 261120
      %v593 = vsel %vm591, %v559, 0
      %v596 = vsel %vm591, %v560, 0
      %v599 = vsel %vm591, %v561, 0
      %v602 = vsel %vm591, %v562, 0
      %v605 = vsel %vm591, %v563, 0
      %v608 = vsel %vm591, %v564, 0
      %v611 = vsel %vm591, %v565, 0
      %v614 = vsel %vm591, %v566, 0
      %v617 = vsel %vm591, %v567, 0
      %v620 = vsel %vm591, %v568, 0
      %v623 = vsel %vm591, %v569, 0
      %v626 = vsel %vm591, %v570, 0
      %v629 = vsel %vm591, %v571, 0
      %v632 = vsel %vm591, %v572, 0
      %v635 = vsel %vm591, %v573, 0
      %v638 = vsel %vm591, %v574, 0
      %640 = vmatprep.subr.bf16.mxu0 0
      %641 = vmatpush1.bf16.msra.mxu0 %v587
      %642 = vmatprep.subr.bf16.mxu0 0
      %643 = vmatpush1.bf16.msra.mxu0 %v588
      %644 = vmatprep.subr.bf16.mxu0 0
      %645 = vmatpush1.bf16.msra.mxu0 0
      %646 = vmatprep.subr.bf16.mxu0 0
      %647 = vmatpush1.bf16.msra.mxu0 0
      %648 = vmatprep.subr.bf16.mxu0 0
      %649 = vmatpush1.bf16.msra.mxu0 0
      %650 = vmatprep.subr.bf16.mxu0 0
      %651 = vmatpush1.bf16.msra.mxu0 0
      %652 = vmatprep.subr.bf16.mxu0 0
      %653 = vmatpush1.bf16.msra.mxu0 0
      %654 = vmatprep.subr.bf16.mxu0 0
      %655 = vmatpush1.bf16.msra.mxu0 0
      %656 = vmatprep.subr.bf16.mxu0 0
      %657 = vmatpush1.bf16.msra.mxu0 0
      %658 = vmatprep.subr.bf16.mxu0 0
      %659 = vmatpush1.bf16.msra.mxu0 0
      %660 = vmatprep.subr.bf16.mxu0 0
      %661 = vmatpush1.bf16.msra.mxu0 0
      %662 = vmatprep.subr.bf16.mxu0 0
      %663 = vmatpush1.bf16.msra.mxu0 0
      %664 = vmatprep.subr.bf16.mxu0 0
      %665 = vmatpush1.bf16.msra.mxu0 0
      %666 = vmatprep.subr.bf16.mxu0 0
      %667 = vmatpush1.bf16.msra.mxu0 0
      %668 = vmatprep.subr.bf16.mxu0 0
      %669 = vmatpush1.bf16.msra.mxu0 0
      %670 = vmatprep.subr.bf16.mxu0 0
      %671 = vmatpush1.bf16.msra.mxu0 0
      %672 = vmatprep.mubr.bf16.mxu0 0
      %673 = vmatmul.mubr.bf16.gmra.mrb[0].mxu0 %v593
      %v674 = vpop.f32.mrb[0].mxu0
      %v675 = vadd.f32 0.0, %v674
      %v676 = vpop.f32.mrb[0].mxu0
      %v677 = vpop.f32.mrb[0].mxu0
      %v678 = vadd.f32 0.0, %v677
      %v679 = vpop.f32.mrb[0].mxu0
      %680 = vmatprep.mubr.bf16.mxu0 0
      %681 = vmatmul.mubr.bf16.gmra.mrb[0].mxu0 %v596
      %v682 = vpop.f32.mrb[0].mxu0
      %v683 = vadd.f32 0.0, %v682
      %v684 = vpop.f32.mrb[0].mxu0
      %v685 = vpop.f32.mrb[0].mxu0
      %v686 = vadd.f32 0.0, %v685
      %v687 = vpop.f32.mrb[0].mxu0
      %688 = vmatprep.mubr.bf16.mxu0 0
      %689 = vmatmul.mubr.bf16.gmra.mrb[0].mxu0 %v599
      %v690 = vpop.f32.mrb[0].mxu0
      %v691 = vadd.f32 0.0, %v690
      %v692 = vpop.f32.mrb[0].mxu0
      %v693 = vpop.f32.mrb[0].mxu0
      %v694 = vadd.f32 0.0, %v693
      %v695 = vpop.f32.mrb[0].mxu0
      %696 = vmatprep.mubr.bf16.mxu0 0
      %697 = vmatmul.mubr.bf16.gmra.mrb[0].mxu0 %v602
      %v698 = vpop.f32.mrb[0].mxu0
      %v699 = vadd.f32 0.0, %v698
      %v700 = vpop.f32.mrb[0].mxu0
      %v701 = vpop.f32.mrb[0].mxu0
      %v702 = vadd.f32 0.0, %v701
      %v703 = vpop.f32.mrb[0].mxu0
      %704 = vmatprep.mubr.bf16.mxu0 0
      %705 = vmatmul.mubr.bf16.gmra.mrb[0].mxu0 %v605
      %v706 = vpop.f32.mrb[0].mxu0
      %v707 = vadd.f32 0.0, %v706
      %v708 = vpop.f32.mrb[0].mxu0
      %v709 = vpop.f32.mrb[0].mxu0
      %v710 = vadd.f32 0.0, %v709
      %v711 = vpop.f32.mrb[0].mxu0
      %712 = vmatprep.mubr.bf16.mxu0 0
      %713 = vmatmul.mubr.bf16.gmra.mrb[0].mxu0 %v608
      %v714 = vpop.f32.mrb[0].mxu0
      %v715 = vadd.f32 0.0, %v714
      %v716 = vpop.f32.mrb[0].mxu0
      %v717 = vpop.f32.mrb[0].mxu0
      %v718 = vadd.f32 0.0, %v717
      %v719 = vpop.f32.mrb[0].mxu0
      %720 = vmatprep.mubr.bf16.mxu0 0
      %721 = vmatmul.mubr.bf16.gmra.mrb[0].mxu0 %v611
      %v722 = vpop.f32.mrb[0].mxu0
      %v723 = vadd.f32 0.0, %v722
      %v724 = vpop.f32.mrb[0].mxu0
      %v725 = vpop.f32.mrb[0].mxu0
      %v726 = vadd.f32 0.0, %v725
      %v727 = vpop.f32.mrb[0].mxu0
      %728 = vmatprep.mubr.bf16.mxu0 0
      %729 = vmatmul.mubr.bf16.gmra.mrb[0].mxu0 %v614
      %v730 = vpop.f32.mrb[0].mxu0
      %v731 = vadd.f32 0.0, %v730
      %v732 = vpop.f32.mrb[0].mxu0
      %v733 = vpop.f32.mrb[0].mxu0
      %v734 = vadd.f32 0.0, %v733
      %v735 = vpop.f32.mrb[0].mxu0
      %736 = vmatprep.mubr.bf16.mxu0 0
      %737 = vmatmul.mubr.bf16.gmra.mrb[0].mxu0 %v617
      %v738 = vpop.f32.mrb[0].mxu0
      %v739 = vadd.f32 0.0, %v738
      %v740 = vpop.f32.mrb[0].mxu0
      %v741 = vpop.f32.mrb[0].mxu0
      %v742 = vadd.f32 0.0, %v741
      %v743 = vpop.f32.mrb[0].mxu0
      %744 = vmatprep.mubr.bf16.mxu0 0
      %745 = vmatmul.mubr.bf16.gmra.mrb[0].mxu0 %v620
      %v746 = vpop.f32.mrb[0].mxu0
      %v747 = vadd.f32 0.0, %v746
      %v748 = vpop.f32.mrb[0].mxu0
      %v749 = vpop.f32.mrb[0].mxu0
      %v750 = vadd.f32 0.0, %v749
      %v751 = vpop.f32.mrb[0].mxu0
      %752 = vmatprep.mubr.bf16.mxu0 0
      %753 = vmatmul.mubr.bf16.gmra.mrb[0].mxu0 %v623
      %v754 = vpop.f32.mrb[0].mxu0
      %v755 = vadd.f32 0.0, %v754
      %v756 = vpop.f32.mrb[0].mxu0
      %v757 = vpop.f32.mrb[0].mxu0
      %v758 = vadd.f32 0.0, %v757
      %v759 = vpop.f32.mrb[0].mxu0
      %760 = vmatprep.mubr.bf16.mxu0 0
      %761 = vmatmul.mubr.bf16.gmra.mrb[0].mxu0 %v626
      %v762 = vpop.f32.mrb[0].mxu0
      %v763 = vadd.f32 0.0, %v762
      %v764 = vpop.f32.mrb[0].mxu0
      %v765 = vpop.f32.mrb[0].mxu0
      %v766 = vadd.f32 0.0, %v765
      %v767 = vpop.f32.mrb[0].mxu0
      %768 = vmatprep.mubr.bf16.mxu0 0
      %769 = vmatmul.mubr.bf16.gmra.mrb[0].mxu0 %v629
      %v770 = vpop.f32.mrb[0].mxu0
      %v771 = vadd.f32 0.0, %v770
      %v772 = vpop.f32.mrb[0].mxu0
      %v773 = vpop.f32.mrb[0].mxu0
      %v774 = vadd.f32 0.0, %v773
      %v775 = vpop.f32.mrb[0].mxu0
      %776 = vmatprep.mubr.bf16.mxu0 0
      %777 = vmatmul.mubr.bf16.gmra.mrb[0].mxu0 %v632
      %v778 = vpop.f32.mrb[0].mxu0
      %v779 = vadd.f32 0.0, %v778
      %v780 = vpop.f32.mrb[0].mxu0
      %v781 = vpop.f32.mrb[0].mxu0
      %v782 = vadd.f32 0.0, %v781
      %v783 = vpop.f32.mrb[0].mxu0
      %784 = vmatprep.mubr.bf16.mxu0 0
      %785 = vmatmul.mubr.bf16.gmra.mrb[0].mxu0 %v635
      %v786 = vpop.f32.mrb[0].mxu0
      %v787 = vadd.f32 0.0, %v786
      %v788 = vpop.f32.mrb[0].mxu0
      %v789 = vpop.f32.mrb[0].mxu0
      %v790 = vadd.f32 0.0, %v789
      %v791 = vpop.f32.mrb[0].mxu0
      %792 = vmatprep.mubr.bf16.mxu0 0
      %793 = vmatmul.mubr.bf16.gmra.mrb[0].mxu0 %v638
      %v794 = vpop.f32.mrb[0].mxu0
      %v795 = vadd.f32 0.0, %v794
      %v796 = vpop.f32.mrb[0].mxu0
      %v797 = vpop.f32.mrb[0].mxu0
      %v798 = vadd.f32 0.0, %v797
      %v799 = vpop.f32.mrb[0].mxu0
      %800 = vdwg.mxu0
      %v801 = vmul.f32 %v675, 0.01
      %v802 = vmul.f32 %v678, 0.01
      %v803 = vmul.f32 %v683, 0.01
      %v804 = vmul.f32 %v686, 0.01
      %v805 = vmul.f32 %v691, 0.01
      %v806 = vmul.f32 %v694, 0.01
      %v807 = vmul.f32 %v699, 0.01
      %v808 = vmul.f32 %v702, 0.01
      %v809 = vmul.f32 %v707, 0.01
      %v810 = vmul.f32 %v710, 0.01
      %v811 = vmul.f32 %v715, 0.01
      %v812 = vmul.f32 %v718, 0.01
      %v813 = vmul.f32 %v723, 0.01
      %v814 = vmul.f32 %v726, 0.01
      %v815 = vmul.f32 %v731, 0.01
      %v816 = vmul.f32 %v734, 0.01
      %v817 = vmul.f32 %v739, 0.01
      %v818 = vmul.f32 %v742, 0.01
      %v819 = vmul.f32 %v747, 0.01
      %v820 = vmul.f32 %v750, 0.01
      %v821 = vmul.f32 %v755, 0.01
      %v822 = vmul.f32 %v758, 0.01
      %v823 = vmul.f32 %v763, 0.01
      %v824 = vmul.f32 %v766, 0.01
      %v825 = vmul.f32 %v771, 0.01
      %v826 = vmul.f32 %v774, 0.01
      %v827 = vmul.f32 %v779, 0.01
      %v828 = vmul.f32 %v782, 0.01
      %v829 = vmul.f32 %v787, 0.01
      %v830 = vmul.f32 %v790, 0.01
      %v831 = vmul.f32 %v795, 0.01
      %v832 = vmul.f32 %v798, 0.01
      %v833 = vmax.f32 %v675, %v801
      %v834 = vmax.f32 %v678, %v802
      %v835 = vmax.f32 %v683, %v803
      %v836 = vmax.f32 %v686, %v804
      %v837 = vmax.f32 %v691, %v805
      %v838 = vmax.f32 %v694, %v806
      %v839 = vmax.f32 %v699, %v807
      %v840 = vmax.f32 %v702, %v808
      %v841 = vmax.f32 %v707, %v809
      %v842 = vmax.f32 %v710, %v810
      %v843 = vmax.f32 %v715, %v811
      %v844 = vmax.f32 %v718, %v812
      %v845 = vmax.f32 %v723, %v813
      %v846 = vmax.f32 %v726, %v814
      %v847 = vmax.f32 %v731, %v815
      %v848 = vmax.f32 %v734, %v816
      %v849 = vmax.f32 %v739, %v817
      %v850 = vmax.f32 %v742, %v818
      %v851 = vmax.f32 %v747, %v819
      %v852 = vmax.f32 %v750, %v820
      %v853 = vmax.f32 %v755, %v821
      %v854 = vmax.f32 %v758, %v822
      %v855 = vmax.f32 %v763, %v823
      %v856 = vmax.f32 %v766, %v824
      %v857 = vmax.f32 %v771, %v825
      %v858 = vmax.f32 %v774, %v826
      %v859 = vmax.f32 %v779, %v827
      %v860 = vmax.f32 %v782, %v828
      %v861 = vmax.f32 %v787, %v829
      %v862 = vmax.f32 %v790, %v830
      %v863 = vmax.f32 %v795, %v831
      %v864 = vmax.f32 %v798, %v832
      %v865 = vpack.c.bf16 %v834, %v833
      %v866 = vpack.c.bf16 %v836, %v835
      %v867 = vpack.c.bf16 %v838, %v837
      %v868 = vpack.c.bf16 %v840, %v839
      %v869 = vpack.c.bf16 %v842, %v841
      %v870 = vpack.c.bf16 %v844, %v843
      %v871 = vpack.c.bf16 %v846, %v845
      %v872 = vpack.c.bf16 %v848, %v847
      %v873 = vpack.c.bf16 %v850, %v849
      %v874 = vpack.c.bf16 %v852, %v851
      %v875 = vpack.c.bf16 %v854, %v853
      %v876 = vpack.c.bf16 %v856, %v855
      %v877 = vpack.c.bf16 %v858, %v857
      %v878 = vpack.c.bf16 %v860, %v859
      %v879 = vpack.c.bf16 %v862, %v861
      %v880 = vpack.c.bf16 %v864, %v863
      %v881 = vld [vmem:[%s3] sm:$0xf]
      %v882 = vld [vmem:[%s3 + $0x4] sm:$0xf]
      %v883 = vld [vmem:[%s3 + $0x8] sm:$0xf]
      %v884 = vld [vmem:[%s3 + $0xc] sm:$0xf]
      %v889 = vunpack.c.l.b16 %v881
      %v890 = vunpack.c.l.b16 %v882
      %v891 = vunpack.c.l.b16 %v883
      %v892 = vunpack.c.l.b16 %v884
      %v893 = vpack.c.b16 %v890, %v889
      %v894 = vpack.c.b16 %v892, %v891
      %v898 = vsel %vm591, %v865, 0
      %v901 = vsel %vm591, %v866, 0
      %v904 = vsel %vm591, %v867, 0
      %v907 = vsel %vm591, %v868, 0
      %v910 = vsel %vm591, %v869, 0
      %v913 = vsel %vm591, %v870, 0
      %v916 = vsel %vm591, %v871, 0
      %v919 = vsel %vm591, %v872, 0
      %v922 = vsel %vm591, %v873, 0
      %v925 = vsel %vm591, %v874, 0
      %v928 = vsel %vm591, %v875, 0
      %v931 = vsel %vm591, %v876, 0
      %v934 = vsel %vm591, %v877, 0
      %v937 = vsel %vm591, %v878, 0
      %v940 = vsel %vm591, %v879, 0
      %v943 = vsel %vm591, %v880, 0
      %945 = vmatprep.subr.bf16.mxu0 0
      %946 = vmatpush1.bf16.msra.mxu0 %v893
      %947 = vmatprep.subr.bf16.mxu0 0
      %948 = vmatpush1.bf16.msra.mxu0 %v894
      %949 = vmatprep.subr.bf16.mxu0 0
      %950 = vmatpush1.bf16.msra.mxu0 0
      %951 = vmatprep.subr.bf16.mxu0 0
      %952 = vmatpush1.bf16.msra.mxu0 0
      %953 = vmatprep.subr.bf16.mxu0 0
      %954 = vmatpush1.bf16.msra.mxu0 0
      %955 = vmatprep.subr.bf16.mxu0 0
      %956 = vmatpush1.bf16.msra.mxu0 0
      %957 = vmatprep.subr.bf16.mxu0 0
      %958 = vmatpush1.bf16.msra.mxu0 0
      %959 = vmatprep.subr.bf16.mxu0 0
      %960 = vmatpush1.bf16.msra.mxu0 0
      %961 = vmatprep.subr.bf16.mxu0 0
      %962 = vmatpush1.bf16.msra.mxu0 0
      %963 = vmatprep.subr.bf16.mxu0 0
      %964 = vmatpush1.bf16.msra.mxu0 0
      %965 = vmatprep.subr.bf16.mxu0 0
      %966 = vmatpush1.bf16.msra.mxu0 0
      %967 = vmatprep.subr.bf16.mxu0 0
      %968 = vmatpush1.bf16.msra.mxu0 0
      %969 = vmatprep.subr.bf16.mxu0 0
      %970 = vmatpush1.bf16.msra.mxu0 0
      %971 = vmatprep.subr.bf16.mxu0 0
      %972 = vmatpush1.bf16.msra.mxu0 0
      %973 = vmatprep.subr.bf16.mxu0 0
      %974 = vmatpush1.bf16.msra.mxu0 0
      %975 = vmatprep.subr.bf16.mxu0 0
      %976 = vmatpush1.bf16.msra.mxu0 0
      %977 = vmatprep.mubr.bf16.mxu0 0
      %978 = vmatmul.mubr.bf16.gmra.mrb[0].mxu0 %v898
      %v979 = vpop.f32.mrb[0].mxu0
      %v980 = vadd.f32 0.0, %v979
      %v981 = vpop.f32.mrb[0].mxu0
      %v982 = vpop.f32.mrb[0].mxu0
      %v983 = vadd.f32 0.0, %v982
      %v984 = vpop.f32.mrb[0].mxu0
      %985 = vmatprep.mubr.bf16.mxu0 0
      %986 = vmatmul.mubr.bf16.gmra.mrb[0].mxu0 %v901
      %v987 = vpop.f32.mrb[0].mxu0
      %v988 = vadd.f32 0.0, %v987
      %v989 = vpop.f32.mrb[0].mxu0
      %v990 = vpop.f32.mrb[0].mxu0
      %v991 = vadd.f32 0.0, %v990
      %v992 = vpop.f32.mrb[0].mxu0
      %993 = vmatprep.mubr.bf16.mxu0 0
      %994 = vmatmul.mubr.bf16.gmra.mrb[0].mxu0 %v904
      %v995 = vpop.f32.mrb[0].mxu0
      %v996 = vadd.f32 0.0, %v995
      %v997 = vpop.f32.mrb[0].mxu0
      %v998 = vpop.f32.mrb[0].mxu0
      %v999 = vadd.f32 0.0, %v998
      %v1000 = vpop.f32.mrb[0].mxu0
      %1001 = vmatprep.mubr.bf16.mxu0 0
      %1002 = vmatmul.mubr.bf16.gmra.mrb[0].mxu0 %v907
      %v1003 = vpop.f32.mrb[0].mxu0
      %v1004 = vadd.f32 0.0, %v1003
      %v1005 = vpop.f32.mrb[0].mxu0
      %v1006 = vpop.f32.mrb[0].mxu0
      %v1007 = vadd.f32 0.0, %v1006
      %v1008 = vpop.f32.mrb[0].mxu0
      %1009 = vmatprep.mubr.bf16.mxu0 0
      %1010 = vmatmul.mubr.bf16.gmra.mrb[0].mxu0 %v910
      %v1011 = vpop.f32.mrb[0].mxu0
      %v1012 = vadd.f32 0.0, %v1011
      %v1013 = vpop.f32.mrb[0].mxu0
      %v1014 = vpop.f32.mrb[0].mxu0
      %v1015 = vadd.f32 0.0, %v1014
      %v1016 = vpop.f32.mrb[0].mxu0
      %1017 = vmatprep.mubr.bf16.mxu0 0
      %1018 = vmatmul.mubr.bf16.gmra.mrb[0].mxu0 %v913
      %v1019 = vpop.f32.mrb[0].mxu0
      %v1020 = vadd.f32 0.0, %v1019
      %v1021 = vpop.f32.mrb[0].mxu0
      %v1022 = vpop.f32.mrb[0].mxu0
      %v1023 = vadd.f32 0.0, %v1022
      %v1024 = vpop.f32.mrb[0].mxu0
      %1025 = vmatprep.mubr.bf16.mxu0 0
      %1026 = vmatmul.mubr.bf16.gmra.mrb[0].mxu0 %v916
      %v1027 = vpop.f32.mrb[0].mxu0
      %v1028 = vadd.f32 0.0, %v1027
      %v1029 = vpop.f32.mrb[0].mxu0
      %v1030 = vpop.f32.mrb[0].mxu0
      %v1031 = vadd.f32 0.0, %v1030
      %v1032 = vpop.f32.mrb[0].mxu0
      %1033 = vmatprep.mubr.bf16.mxu0 0
      %1034 = vmatmul.mubr.bf16.gmra.mrb[0].mxu0 %v919
      %v1035 = vpop.f32.mrb[0].mxu0
      %v1036 = vadd.f32 0.0, %v1035
      %v1037 = vpop.f32.mrb[0].mxu0
      %v1038 = vpop.f32.mrb[0].mxu0
      %v1039 = vadd.f32 0.0, %v1038
      %v1040 = vpop.f32.mrb[0].mxu0
      %1041 = vmatprep.mubr.bf16.mxu0 0
      %1042 = vmatmul.mubr.bf16.gmra.mrb[0].mxu0 %v922
      %v1043 = vpop.f32.mrb[0].mxu0
      %v1044 = vadd.f32 0.0, %v1043
      %v1045 = vpop.f32.mrb[0].mxu0
      %v1046 = vpop.f32.mrb[0].mxu0
      %v1047 = vadd.f32 0.0, %v1046
      %v1048 = vpop.f32.mrb[0].mxu0
      %1049 = vmatprep.mubr.bf16.mxu0 0
      %1050 = vmatmul.mubr.bf16.gmra.mrb[0].mxu0 %v925
      %v1051 = vpop.f32.mrb[0].mxu0
      %v1052 = vadd.f32 0.0, %v1051
      %v1053 = vpop.f32.mrb[0].mxu0
      %v1054 = vpop.f32.mrb[0].mxu0
      %v1055 = vadd.f32 0.0, %v1054
      %v1056 = vpop.f32.mrb[0].mxu0
      %1057 = vmatprep.mubr.bf16.mxu0 0
      %1058 = vmatmul.mubr.bf16.gmra.mrb[0].mxu0 %v928
      %v1059 = vpop.f32.mrb[0].mxu0
      %v1060 = vadd.f32 0.0, %v1059
      %v1061 = vpop.f32.mrb[0].mxu0
      %v1062 = vpop.f32.mrb[0].mxu0
      %v1063 = vadd.f32 0.0, %v1062
      %v1064 = vpop.f32.mrb[0].mxu0
      %1065 = vmatprep.mubr.bf16.mxu0 0
      %1066 = vmatmul.mubr.bf16.gmra.mrb[0].mxu0 %v931
      %v1067 = vpop.f32.mrb[0].mxu0
      %v1068 = vadd.f32 0.0, %v1067
      %v1069 = vpop.f32.mrb[0].mxu0
      %v1070 = vpop.f32.mrb[0].mxu0
      %v1071 = vadd.f32 0.0, %v1070
      %v1072 = vpop.f32.mrb[0].mxu0
      %1073 = vmatprep.mubr.bf16.mxu0 0
      %1074 = vmatmul.mubr.bf16.gmra.mrb[0].mxu0 %v934
      %v1075 = vpop.f32.mrb[0].mxu0
      %v1076 = vadd.f32 0.0, %v1075
      %v1077 = vpop.f32.mrb[0].mxu0
      %v1078 = vpop.f32.mrb[0].mxu0
      %v1079 = vadd.f32 0.0, %v1078
      %v1080 = vpop.f32.mrb[0].mxu0
      %1081 = vmatprep.mubr.bf16.mxu0 0
      %1082 = vmatmul.mubr.bf16.gmra.mrb[0].mxu0 %v937
      %v1083 = vpop.f32.mrb[0].mxu0
      %v1084 = vadd.f32 0.0, %v1083
      %v1085 = vpop.f32.mrb[0].mxu0
      %v1086 = vpop.f32.mrb[0].mxu0
      %v1087 = vadd.f32 0.0, %v1086
      %v1088 = vpop.f32.mrb[0].mxu0
      %1089 = vmatprep.mubr.bf16.mxu0 0
      %1090 = vmatmul.mubr.bf16.gmra.mrb[0].mxu0 %v940
      %v1091 = vpop.f32.mrb[0].mxu0
      %v1092 = vadd.f32 0.0, %v1091
      %v1093 = vpop.f32.mrb[0].mxu0
      %v1094 = vpop.f32.mrb[0].mxu0
      %v1095 = vadd.f32 0.0, %v1094
      %v1096 = vpop.f32.mrb[0].mxu0
      %1097 = vmatprep.mubr.bf16.mxu0 0
      %1098 = vmatmul.mubr.bf16.gmra.mrb[0].mxu0 %v943
      %v1099 = vpop.f32.mrb[0].mxu0
      %v1100 = vadd.f32 0.0, %v1099
      %v1101 = vpop.f32.mrb[0].mxu0
      %v1102 = vpop.f32.mrb[0].mxu0
      %v1103 = vadd.f32 0.0, %v1102
      %v1104 = vpop.f32.mrb[0].mxu0
      %1105 = vdwg.mxu0
      %v1106 = vmul.f32 %v980, 0.01
      %v1107 = vmul.f32 %v983, 0.01
      %v1108 = vmul.f32 %v988, 0.01
      %v1109 = vmul.f32 %v991, 0.01
      %v1110 = vmul.f32 %v996, 0.01
      %v1111 = vmul.f32 %v999, 0.01
      %v1112 = vmul.f32 %v1004, 0.01
      %v1113 = vmul.f32 %v1007, 0.01
      %v1114 = vmul.f32 %v1012, 0.01
      %v1115 = vmul.f32 %v1015, 0.01
      %v1116 = vmul.f32 %v1020, 0.01
      %v1117 = vmul.f32 %v1023, 0.01
      %v1118 = vmul.f32 %v1028, 0.01
      %v1119 = vmul.f32 %v1031, 0.01
      %v1120 = vmul.f32 %v1036, 0.01
      %v1121 = vmul.f32 %v1039, 0.01
      %v1122 = vmul.f32 %v1044, 0.01
      %v1123 = vmul.f32 %v1047, 0.01
      %v1124 = vmul.f32 %v1052, 0.01
      %v1125 = vmul.f32 %v1055, 0.01
      %v1126 = vmul.f32 %v1060, 0.01
      %v1127 = vmul.f32 %v1063, 0.01
      %v1128 = vmul.f32 %v1068, 0.01
      %v1129 = vmul.f32 %v1071, 0.01
      %v1130 = vmul.f32 %v1076, 0.01
      %v1131 = vmul.f32 %v1079, 0.01
      %v1132 = vmul.f32 %v1084, 0.01
      %v1133 = vmul.f32 %v1087, 0.01
      %v1134 = vmul.f32 %v1092, 0.01
      %v1135 = vmul.f32 %v1095, 0.01
      %v1136 = vmul.f32 %v1100, 0.01
      %v1137 = vmul.f32 %v1103, 0.01
      %v1138 = vmax.f32 %v980, %v1106
      %v1139 = vmax.f32 %v983, %v1107
      %v1140 = vmax.f32 %v988, %v1108
      %v1141 = vmax.f32 %v991, %v1109
      %v1142 = vmax.f32 %v996, %v1110
      %v1143 = vmax.f32 %v999, %v1111
      %v1144 = vmax.f32 %v1004, %v1112
      %v1145 = vmax.f32 %v1007, %v1113
      %v1146 = vmax.f32 %v1012, %v1114
      %v1147 = vmax.f32 %v1015, %v1115
      %v1148 = vmax.f32 %v1020, %v1116
      %v1149 = vmax.f32 %v1023, %v1117
      %v1150 = vmax.f32 %v1028, %v1118
      %v1151 = vmax.f32 %v1031, %v1119
      %v1152 = vmax.f32 %v1036, %v1120
      %v1153 = vmax.f32 %v1039, %v1121
      %v1154 = vmax.f32 %v1044, %v1122
      %v1155 = vmax.f32 %v1047, %v1123
      %v1156 = vmax.f32 %v1052, %v1124
      %v1157 = vmax.f32 %v1055, %v1125
      %v1158 = vmax.f32 %v1060, %v1126
      %v1159 = vmax.f32 %v1063, %v1127
      %v1160 = vmax.f32 %v1068, %v1128
      %v1161 = vmax.f32 %v1071, %v1129
      %v1162 = vmax.f32 %v1076, %v1130
      %v1163 = vmax.f32 %v1079, %v1131
      %v1164 = vmax.f32 %v1084, %v1132
      %v1165 = vmax.f32 %v1087, %v1133
      %v1166 = vmax.f32 %v1092, %v1134
      %v1167 = vmax.f32 %v1095, %v1135
      %v1168 = vmax.f32 %v1100, %v1136
      %v1169 = vmax.f32 %v1103, %v1137
      %v1170 = vpack.c.bf16 %v1139, %v1138
      %v1171 = vpack.c.bf16 %v1141, %v1140
      %v1172 = vpack.c.bf16 %v1143, %v1142
      %v1173 = vpack.c.bf16 %v1145, %v1144
      %v1174 = vpack.c.bf16 %v1147, %v1146
      %v1175 = vpack.c.bf16 %v1149, %v1148
      %v1176 = vpack.c.bf16 %v1151, %v1150
      %v1177 = vpack.c.bf16 %v1153, %v1152
      %v1178 = vpack.c.bf16 %v1155, %v1154
      %v1179 = vpack.c.bf16 %v1157, %v1156
      %v1180 = vpack.c.bf16 %v1159, %v1158
      %v1181 = vpack.c.bf16 %v1161, %v1160
      %v1182 = vpack.c.bf16 %v1163, %v1162
      %v1183 = vpack.c.bf16 %v1165, %v1164
      %v1184 = vpack.c.bf16 %v1167, %v1166
      %v1185 = vpack.c.bf16 %v1169, %v1168
      %v1186 = vld [vmem:[%s4] sm:$0xf]
      %v1187 = vld [vmem:[%s4 + $0x4] sm:$0xf]
      %v1188 = vld [vmem:[%s4 + $0x8] sm:$0xf]
      %v1189 = vld [vmem:[%s4 + $0xc] sm:$0xf]
      %v1194 = vunpack.c.l.b16 %v1186
      %v1195 = vunpack.c.l.b16 %v1187
      %v1196 = vunpack.c.l.b16 %v1188
      %v1197 = vunpack.c.l.b16 %v1189
      %v1198 = vpack.c.b16 %v1195, %v1194
      %v1199 = vpack.c.b16 %v1197, %v1196
      %v1203 = vsel %vm591, %v1170, 0
      %v1206 = vsel %vm591, %v1171, 0
      %v1209 = vsel %vm591, %v1172, 0
      %v1212 = vsel %vm591, %v1173, 0
      %v1215 = vsel %vm591, %v1174, 0
      %v1218 = vsel %vm591, %v1175, 0
      %v1221 = vsel %vm591, %v1176, 0
      %v1224 = vsel %vm591, %v1177, 0
      %v1227 = vsel %vm591, %v1178, 0
      %v1230 = vsel %vm591, %v1179, 0
      %v1233 = vsel %vm591, %v1180, 0
      %v1236 = vsel %vm591, %v1181, 0
      %v1239 = vsel %vm591, %v1182, 0
      %v1242 = vsel %vm591, %v1183, 0
      %v1245 = vsel %vm591, %v1184, 0
      %v1248 = vsel %vm591, %v1185, 0
      %1250 = vmatprep.subr.bf16.mxu0 0
      %1251 = vmatpush1.bf16.msra.mxu0 %v1198
      %1252 = vmatprep.subr.bf16.mxu0 0
      %1253 = vmatpush1.bf16.msra.mxu0 %v1199
      %1254 = vmatprep.subr.bf16.mxu0 0
      %1255 = vmatpush1.bf16.msra.mxu0 0
      %1256 = vmatprep.subr.bf16.mxu0 0
      %1257 = vmatpush1.bf16.msra.mxu0 0
      %1258 = vmatprep.subr.bf16.mxu0 0
      %1259 = vmatpush1.bf16.msra.mxu0 0
      %1260 = vmatprep.subr.bf16.mxu0 0
      %1261 = vmatpush1.bf16.msra.mxu0 0
      %1262 = vmatprep.subr.bf16.mxu0 0
      %1263 = vmatpush1.bf16.msra.mxu0 0
      %1264 = vmatprep.subr.bf16.mxu0 0
      %1265 = vmatpush1.bf16.msra.mxu0 0
      %1266 = vmatprep.subr.bf16.mxu0 0
      %1267 = vmatpush1.bf16.msra.mxu0 0
      %1268 = vmatprep.subr.bf16.mxu0 0
      %1269 = vmatpush1.bf16.msra.mxu0 0
      %1270 = vmatprep.subr.bf16.mxu0 0
      %1271 = vmatpush1.bf16.msra.mxu0 0
      %1272 = vmatprep.subr.bf16.mxu0 0
      %1273 = vmatpush1.bf16.msra.mxu0 0
      %1274 = vmatprep.subr.bf16.mxu0 0
      %1275 = vmatpush1.bf16.msra.mxu0 0
      %1276 = vmatprep.subr.bf16.mxu0 0
      %1277 = vmatpush1.bf16.msra.mxu0 0
      %1278 = vmatprep.subr.bf16.mxu0 0
      %1279 = vmatpush1.bf16.msra.mxu0 0
      %1280 = vmatprep.subr.bf16.mxu0 0
      %1281 = vmatpush1.bf16.msra.mxu0 0
      %1282 = vmatprep.mubr.bf16.mxu0 0
      %1283 = vmatmul.mubr.bf16.gmra.mrb[0].mxu0 %v1203
      %v1284 = vpop.f32.mrb[0].mxu0
      %v1285 = vadd.f32 0.0, %v1284
      %v1286 = vpop.f32.mrb[0].mxu0
      %v1287 = vpop.f32.mrb[0].mxu0
      %v1288 = vadd.f32 0.0, %v1287
      %v1289 = vpop.f32.mrb[0].mxu0
      %1290 = vmatprep.mubr.bf16.mxu0 0
      %1291 = vmatmul.mubr.bf16.gmra.mrb[0].mxu0 %v1206
      %v1292 = vpop.f32.mrb[0].mxu0
      %v1293 = vadd.f32 0.0, %v1292
      %v1294 = vpop.f32.mrb[0].mxu0
      %v1295 = vpop.f32.mrb[0].mxu0
      %v1296 = vadd.f32 0.0, %v1295
      %v1297 = vpop.f32.mrb[0].mxu0
      %1298 = vmatprep.mubr.bf16.mxu0 0
      %1299 = vmatmul.mubr.bf16.gmra.mrb[0].mxu0 %v1209
      %v1300 = vpop.f32.mrb[0].mxu0
      %v1301 = vadd.f32 0.0, %v1300
      %v1302 = vpop.f32.mrb[0].mxu0
      %v1303 = vpop.f32.mrb[0].mxu0
      %v1304 = vadd.f32 0.0, %v1303
      %v1305 = vpop.f32.mrb[0].mxu0
      %1306 = vmatprep.mubr.bf16.mxu0 0
      %1307 = vmatmul.mubr.bf16.gmra.mrb[0].mxu0 %v1212
      %v1308 = vpop.f32.mrb[0].mxu0
      %v1309 = vadd.f32 0.0, %v1308
      %v1310 = vpop.f32.mrb[0].mxu0
      %v1311 = vpop.f32.mrb[0].mxu0
      %v1312 = vadd.f32 0.0, %v1311
      %v1313 = vpop.f32.mrb[0].mxu0
      %1314 = vmatprep.mubr.bf16.mxu0 0
      %1315 = vmatmul.mubr.bf16.gmra.mrb[0].mxu0 %v1215
      %v1316 = vpop.f32.mrb[0].mxu0
      %v1317 = vadd.f32 0.0, %v1316
      %v1318 = vpop.f32.mrb[0].mxu0
      %v1319 = vpop.f32.mrb[0].mxu0
      %v1320 = vadd.f32 0.0, %v1319
      %v1321 = vpop.f32.mrb[0].mxu0
      %1322 = vmatprep.mubr.bf16.mxu0 0
      %1323 = vmatmul.mubr.bf16.gmra.mrb[0].mxu0 %v1218
      %v1324 = vpop.f32.mrb[0].mxu0
      %v1325 = vadd.f32 0.0, %v1324
      %v1326 = vpop.f32.mrb[0].mxu0
      %v1327 = vpop.f32.mrb[0].mxu0
      %v1328 = vadd.f32 0.0, %v1327
      %v1329 = vpop.f32.mrb[0].mxu0
      %1330 = vmatprep.mubr.bf16.mxu0 0
      %1331 = vmatmul.mubr.bf16.gmra.mrb[0].mxu0 %v1221
      %v1332 = vpop.f32.mrb[0].mxu0
      %v1333 = vadd.f32 0.0, %v1332
      %v1334 = vpop.f32.mrb[0].mxu0
      %v1335 = vpop.f32.mrb[0].mxu0
      %v1336 = vadd.f32 0.0, %v1335
      %v1337 = vpop.f32.mrb[0].mxu0
      %1338 = vmatprep.mubr.bf16.mxu0 0
      %1339 = vmatmul.mubr.bf16.gmra.mrb[0].mxu0 %v1224
      %v1340 = vpop.f32.mrb[0].mxu0
      %v1341 = vadd.f32 0.0, %v1340
      %v1342 = vpop.f32.mrb[0].mxu0
      %v1343 = vpop.f32.mrb[0].mxu0
      %v1344 = vadd.f32 0.0, %v1343
      %v1345 = vpop.f32.mrb[0].mxu0
      %1346 = vmatprep.mubr.bf16.mxu0 0
      %1347 = vmatmul.mubr.bf16.gmra.mrb[0].mxu0 %v1227
      %v1348 = vpop.f32.mrb[0].mxu0
      %v1349 = vadd.f32 0.0, %v1348
      %v1350 = vpop.f32.mrb[0].mxu0
      %v1351 = vpop.f32.mrb[0].mxu0
      %v1352 = vadd.f32 0.0, %v1351
      %v1353 = vpop.f32.mrb[0].mxu0
      %1354 = vmatprep.mubr.bf16.mxu0 0
      %1355 = vmatmul.mubr.bf16.gmra.mrb[0].mxu0 %v1230
      %v1356 = vpop.f32.mrb[0].mxu0
      %v1357 = vadd.f32 0.0, %v1356
      %v1358 = vpop.f32.mrb[0].mxu0
      %v1359 = vpop.f32.mrb[0].mxu0
      %v1360 = vadd.f32 0.0, %v1359
      %v1361 = vpop.f32.mrb[0].mxu0
      %1362 = vmatprep.mubr.bf16.mxu0 0
      %1363 = vmatmul.mubr.bf16.gmra.mrb[0].mxu0 %v1233
      %v1364 = vpop.f32.mrb[0].mxu0
      %v1365 = vadd.f32 0.0, %v1364
      %v1366 = vpop.f32.mrb[0].mxu0
      %v1367 = vpop.f32.mrb[0].mxu0
      %v1368 = vadd.f32 0.0, %v1367
      %v1369 = vpop.f32.mrb[0].mxu0
      %1370 = vmatprep.mubr.bf16.mxu0 0
      %1371 = vmatmul.mubr.bf16.gmra.mrb[0].mxu0 %v1236
      %v1372 = vpop.f32.mrb[0].mxu0
      %v1373 = vadd.f32 0.0, %v1372
      %v1374 = vpop.f32.mrb[0].mxu0
      %v1375 = vpop.f32.mrb[0].mxu0
      %v1376 = vadd.f32 0.0, %v1375
      %v1377 = vpop.f32.mrb[0].mxu0
      %1378 = vmatprep.mubr.bf16.mxu0 0
      %1379 = vmatmul.mubr.bf16.gmra.mrb[0].mxu0 %v1239
      %v1380 = vpop.f32.mrb[0].mxu0
      %v1381 = vadd.f32 0.0, %v1380
      %v1382 = vpop.f32.mrb[0].mxu0
      %v1383 = vpop.f32.mrb[0].mxu0
      %v1384 = vadd.f32 0.0, %v1383
      %v1385 = vpop.f32.mrb[0].mxu0
      %1386 = vmatprep.mubr.bf16.mxu0 0
      %1387 = vmatmul.mubr.bf16.gmra.mrb[0].mxu0 %v1242
      %v1388 = vpop.f32.mrb[0].mxu0
      %v1389 = vadd.f32 0.0, %v1388
      %v1390 = vpop.f32.mrb[0].mxu0
      %v1391 = vpop.f32.mrb[0].mxu0
      %v1392 = vadd.f32 0.0, %v1391
      %v1393 = vpop.f32.mrb[0].mxu0
      %1394 = vmatprep.mubr.bf16.mxu0 0
      %1395 = vmatmul.mubr.bf16.gmra.mrb[0].mxu0 %v1245
      %v1396 = vpop.f32.mrb[0].mxu0
      %v1397 = vadd.f32 0.0, %v1396
      %v1398 = vpop.f32.mrb[0].mxu0
      %v1399 = vpop.f32.mrb[0].mxu0
      %v1400 = vadd.f32 0.0, %v1399
      %v1401 = vpop.f32.mrb[0].mxu0
      %1402 = vmatprep.mubr.bf16.mxu0 0
      %1403 = vmatmul.mubr.bf16.gmra.mrb[0].mxu0 %v1248
      %v1404 = vpop.f32.mrb[0].mxu0
      %v1405 = vadd.f32 0.0, %v1404
      %v1406 = vpop.f32.mrb[0].mxu0
      %v1407 = vpop.f32.mrb[0].mxu0
      %v1408 = vadd.f32 0.0, %v1407
      %v1409 = vpop.f32.mrb[0].mxu0
      %1410 = vdwg.mxu0
      %v1411 = vmul.f32 %v1285, 0.01
      %v1412 = vmul.f32 %v1288, 0.01
      %v1413 = vmul.f32 %v1293, 0.01
      %v1414 = vmul.f32 %v1296, 0.01
      %v1415 = vmul.f32 %v1301, 0.01
      %v1416 = vmul.f32 %v1304, 0.01
      %v1417 = vmul.f32 %v1309, 0.01
      %v1418 = vmul.f32 %v1312, 0.01
      %v1419 = vmul.f32 %v1317, 0.01
      %v1420 = vmul.f32 %v1320, 0.01
      %v1421 = vmul.f32 %v1325, 0.01
      %v1422 = vmul.f32 %v1328, 0.01
      %v1423 = vmul.f32 %v1333, 0.01
      %v1424 = vmul.f32 %v1336, 0.01
      %v1425 = vmul.f32 %v1341, 0.01
      %v1426 = vmul.f32 %v1344, 0.01
      %v1427 = vmul.f32 %v1349, 0.01
      %v1428 = vmul.f32 %v1352, 0.01
      %v1429 = vmul.f32 %v1357, 0.01
      %v1430 = vmul.f32 %v1360, 0.01
      %v1431 = vmul.f32 %v1365, 0.01
      %v1432 = vmul.f32 %v1368, 0.01
      %v1433 = vmul.f32 %v1373, 0.01
      %v1434 = vmul.f32 %v1376, 0.01
      %v1435 = vmul.f32 %v1381, 0.01
      %v1436 = vmul.f32 %v1384, 0.01
      %v1437 = vmul.f32 %v1389, 0.01
      %v1438 = vmul.f32 %v1392, 0.01
      %v1439 = vmul.f32 %v1397, 0.01
      %v1440 = vmul.f32 %v1400, 0.01
      %v1441 = vmul.f32 %v1405, 0.01
      %v1442 = vmul.f32 %v1408, 0.01
      %v1443 = vmax.f32 %v1285, %v1411
      %v1444 = vmax.f32 %v1288, %v1412
      %v1445 = vmax.f32 %v1293, %v1413
      %v1446 = vmax.f32 %v1296, %v1414
      %v1447 = vmax.f32 %v1301, %v1415
      %v1448 = vmax.f32 %v1304, %v1416
      %v1449 = vmax.f32 %v1309, %v1417
      %v1450 = vmax.f32 %v1312, %v1418
      %v1451 = vmax.f32 %v1317, %v1419
      %v1452 = vmax.f32 %v1320, %v1420
      %v1453 = vmax.f32 %v1325, %v1421
      %v1454 = vmax.f32 %v1328, %v1422
      %v1455 = vmax.f32 %v1333, %v1423
      %v1456 = vmax.f32 %v1336, %v1424
      %v1457 = vmax.f32 %v1341, %v1425
      %v1458 = vmax.f32 %v1344, %v1426
      %v1459 = vmax.f32 %v1349, %v1427
      %v1460 = vmax.f32 %v1352, %v1428
      %v1461 = vmax.f32 %v1357, %v1429
      %v1462 = vmax.f32 %v1360, %v1430
      %v1463 = vmax.f32 %v1365, %v1431
      %v1464 = vmax.f32 %v1368, %v1432
      %v1465 = vmax.f32 %v1373, %v1433
      %v1466 = vmax.f32 %v1376, %v1434
      %v1467 = vmax.f32 %v1381, %v1435
      %v1468 = vmax.f32 %v1384, %v1436
      %v1469 = vmax.f32 %v1389, %v1437
      %v1470 = vmax.f32 %v1392, %v1438
      %v1471 = vmax.f32 %v1397, %v1439
      %v1472 = vmax.f32 %v1400, %v1440
      %v1473 = vmax.f32 %v1405, %v1441
      %v1474 = vmax.f32 %v1408, %v1442
      %vm1475 = vcmask 7168
      %1476 = vst.msk [vmem:[%s226] sm:$0xff] %vm1475, %v1443
      %1477 = vst.msk [vmem:[%s226 + $0x8] sm:$0xff] %vm1475, %v1444
      %1478 = vst.msk [vmem:[%s226 + $0x10] sm:$0xff] %vm1475, %v1445
      %1479 = vst.msk [vmem:[%s226 + $0x18] sm:$0xff] %vm1475, %v1446
      %1480 = vst.msk [vmem:[%s226 + $0x20] sm:$0xff] %vm1475, %v1447
      %1481 = vst.msk [vmem:[%s226 + $0x28] sm:$0xff] %vm1475, %v1448
      %1482 = vst.msk [vmem:[%s226 + $0x30] sm:$0xff] %vm1475, %v1449
      %1483 = vst.msk [vmem:[%s226 + $0x38] sm:$0xff] %vm1475, %v1450
      %1484 = vst.msk [vmem:[%s226 + $0x40] sm:$0xff] %vm1475, %v1451
      %1485 = vst.msk [vmem:[%s226 + $0x48] sm:$0xff] %vm1475, %v1452
      %1486 = vst.msk [vmem:[%s226 + $0x50] sm:$0xff] %vm1475, %v1453
      %1487 = vst.msk [vmem:[%s226 + $0x58] sm:$0xff] %vm1475, %v1454
      %1488 = vst.msk [vmem:[%s226 + $0x60] sm:$0xff] %vm1475, %v1455
      %1489 = vst.msk [vmem:[%s226 + $0x68] sm:$0xff] %vm1475, %v1456
      %1490 = vst.msk [vmem:[%s226 + $0x70] sm:$0xff] %vm1475, %v1457
      %1491 = vst.msk [vmem:[%s226 + $0x78] sm:$0xff] %vm1475, %v1458
      %1492 = vst.msk [vmem:[%s226 + $0x80] sm:$0xff] %vm1475, %v1459
      %1493 = vst.msk [vmem:[%s226 + $0x88] sm:$0xff] %vm1475, %v1460
      %1494 = vst.msk [vmem:[%s226 + $0x90] sm:$0xff] %vm1475, %v1461
      %1495 = vst.msk [vmem:[%s226 + $0x98] sm:$0xff] %vm1475, %v1462
      %1496 = vst.msk [vmem:[%s226 + $0xa0] sm:$0xff] %vm1475, %v1463
      %1497 = vst.msk [vmem:[%s226 + $0xa8] sm:$0xff] %vm1475, %v1464
      %1498 = vst.msk [vmem:[%s226 + $0xb0] sm:$0xff] %vm1475, %v1465
      %1499 = vst.msk [vmem:[%s226 + $0xb8] sm:$0xff] %vm1475, %v1466
      %1500 = vst.msk [vmem:[%s226 + $0xc0] sm:$0xff] %vm1475, %v1467
      %1501 = vst.msk [vmem:[%s226 + $0xc8] sm:$0xff] %vm1475, %v1468
      %1502 = vst.msk [vmem:[%s226 + $0xd0] sm:$0xff] %vm1475, %v1469
      %1503 = vst.msk [vmem:[%s226 + $0xd8] sm:$0xff] %vm1475, %v1470
      %1504 = vst.msk [vmem:[%s226 + $0xe0] sm:$0xff] %vm1475, %v1471
      %1505 = vst.msk [vmem:[%s226 + $0xe8] sm:$0xff] %vm1475, %v1472
      %1506 = vst.msk [vmem:[%s226 + $0xf0] sm:$0xff] %vm1475, %v1473
      %1507 = vst.msk [vmem:[%s226 + $0xf8] sm:$0xff] %vm1475, %v1474
      %s1508 = smul.u32 32, %s16
      %p1509 = scmp.lt.s32.totalorder %s1508, 127
      %s1510 = scalar_select %p1509, %s1508, 127
      %s1511 = smul.addr %s1510, 8
      %s1512 = scalar_lea.vmem %s5, %s1511
      // Predicated region
      $region41: #{submlp_forward.1} parent=39 // pred_check
        %p1513 = pneg %p144
      $region42: #{submlp_forward.1} parent=39 // pred_check_branch
        %1515 = sbr.rel (%p1513) target = $region44
      $region43: #{submlp_forward.1} parent=39 // pred_region
        %s1516 = smul.u32 32, %s16
      $region44: #{submlp_forward.1} parent=39 // pred_fallthru
        _
    $region40: #{submlp_forward.1} parent=5 // pred_fallthru
      _
    %p1517 = scmp.le.s32.totalorder 2, %s11
    // Predicated region
    $region45: #{submlp_forward.1} parent=5 // pred_check
      %p1518 = pneg %p1517
    $region46: #{submlp_forward.1} parent=5 // pred_check_branch
      %1520 = sbr.rel (%p1518) target = $region48
    $region47: #{submlp_forward.1} parent=5 // pred_region
      %s1521 = ssub.s32 %s11, 2
      // Predicated region
      $region49: #{submlp_forward.1} parent=47 // pred_check
        %p1522 = pneg %p150
      $region50: #{submlp_forward.1} parent=47 // pred_check_branch
        %1524 = sbr.rel (%p1522) target = $region52
      $region51: #{submlp_forward.1} parent=47 // pred_region
        %s1525 = smul.u32 32, %s17
        %p1526 = scmp.lt.s32.totalorder %s1525, 127
        %s1527 = scalar_select %p1526, %s1525, 127
        %s1528 = smul.addr %s1527, 8
        %s1529 = scalar_lea.vmem %s5, %s1528
      $region52: #{submlp_forward.1} parent=47 // pred_fallthru
        _
    $region48: #{submlp_forward.1} parent=5 // pred_fallthru
      _
  $region6: #{submlp_forward.1} parent=0 // loop_footer
    %s15 = sadd.s32 1, %s11
  $region7: #{submlp_forward.1} parent=0 // loop_footer_branch
    %10 = sbr.rel target = $region3
  $region8: #{submlp_forward.1} parent=0 // loop_exit
    _

</llo_original>
